<compile_context>
chip_gen: v5e
topology: v5e:2x2
jax: 0.10.0
libtpu: 0.0.40
codegen_flags: <defaults>
</compile_context>

<pallas_src>
import jax
import jax.numpy as jnp
from jax.experimental import pallas as pl
from jax.experimental.pallas import tpu as pltpu


# Scoped-VMEM request. 48 MiB is safe on every generation (v5e/v6e: 128 MiB
# physical; v7x: 64 MiB physical) while still enabling 512-2048 lane tiles.
_VMEM_LIMIT_BYTES = 48 * 1024 * 1024


def _stable_softmax_dim0_kernel(x_ref, o_ref):
    # Per-column max (XLU reduce) -> stabilized exp written straight into the
    # output buffer (reused as scratch) -> per-column sum -> scale in place.
    x = x_ref[...]
    m = jnp.max(x, axis=0, keepdims=True)              # (1, tile_h)
    o_ref[...] = jnp.exp(x - m)                        # exp scratch == output
    total = jnp.sum(o_ref[...], axis=0, keepdims=True)  # (1, tile_h)
    inv = pl.reciprocal(total, approx=False)            # exact: keeps 1e-6 tol
    o_ref[...] = o_ref[...] * inv


def _pick_tile_h(S: int, H: int, itemsize: int) -> int:
    """Largest multiple-of-128 lane tile whose pipelined buffers fit VMEM."""
    if H <= 128:
        # Full-extent last dim is always a legal block shape; single grid step.
        return H
    budget = int(_VMEM_LIMIT_BYTES * 0.8)          # ~20% headroom for misc
    per_lane_bytes = 4 * S * itemsize              # 2 in-bufs + 2 out-bufs
    max_lanes = budget // max(per_lane_bytes, 1)
    tile_h = (max_lanes // 128) * 128
    tile_h = max(128, min(2048, tile_h))           # clamp to sane range
    # No point exceeding H rounded up to the lane width.
    tile_h = min(tile_h, ((H + 127) // 128) * 128)
    return tile_h
    # TODO(synk): for extremely large S (full (S, tile_h) column no longer fits
    # even at tile_h=128), switch to a two-pass grid over S with a (1, tile_h)
    # accumulator; not needed at these shapes.


def stable_softmax(x: jax.Array, *, tile_h: int | None = None) -> jax.Array:
    """Stable softmax over axis 0 (matches StableSoftmax.forward). x: (S, H)."""
    S, H = x.shape
    if tile_h is None:
        tile_h = _pick_tile_h(S, H, jnp.dtype(x.dtype).itemsize)

    grid = (pl.cdiv(H, tile_h),)  # ragged last block is fine: columns independent
    return pl.pallas_call(
        _stable_softmax_dim0_kernel,
        out_shape=jax.ShapeDtypeStruct((S, H), x.dtype),
        grid_spec=pltpu.PrefetchScalarGridSpec(
            num_scalar_prefetch=0,
            grid=grid,
            # Each grid step sees the FULL reduction axis (S) and one lane
            # tile of H, so the axis-0 max/sum complete within one invocation.
            in_specs=[pl.BlockSpec((S, tile_h), lambda j: (0, j))],
            out_specs=pl.BlockSpec((S, tile_h), lambda j: (0, j)),
        ),
        compiler_params=pltpu.CompilerParams(
            dimension_semantics=("parallel",),
            vmem_limit_bytes=_VMEM_LIMIT_BYTES,
        ),
    )(x)


def _reference(x):
    c = jnp.max(x, axis=0, keepdims=True)
    x_exp = jnp.exp(x - c)
    total = jnp.sum(x_exp, axis=0, keepdims=True)
    return x_exp / total


if __name__ == "__main__":
    key = jax.random.PRNGKey(0)
    # Small 2-D activation implied by the forward: softmax over dim 0.
    S, H = 8, 32
    # Include some large-magnitude values to exercise the stabilization path.
    x = jax.random.normal(key, (S, H), dtype=jnp.float32) * 50.0

    out = stable_softmax(x)
    out = jax.block_until_ready(out)

    ref = _reference(x)
    assert out.shape == (S, H) and out.dtype == jnp.float32
    assert bool(jnp.all(jnp.isfinite(out))), "non-finite outputs"
    assert jnp.allclose(out, ref, atol=1e-6, rtol=1e-6), "mismatch vs reference"

    # Also exercise a larger / ragged-H shape to cover the cdiv grid path.
    S2, H2 = 64, 640 + 64  # H2 not a multiple of 128
    x2 = jax.random.normal(jax.random.PRNGKey(1), (S2, H2), dtype=jnp.float32) * 30.0
    out2 = jax.block_until_ready(stable_softmax(x2, tile_h=256))
    assert jnp.allclose(out2, _reference(x2), atol=1e-6, rtol=1e-6), "ragged-H mismatch"

    print("KERNEL_OK")
</pallas_src>

<mosaic_0001>
module attributes {stable_mosaic.version = 11 : i64} {
  func.func @_stable_softmax_dim0_kernel(%arg0: i32, %arg1: memref<8x32xf32, #tpu.memory_space<vmem>>, %arg2: memref<8x32xf32, #tpu.memory_space<vmem>>) attributes {dimension_semantics = [#tpu.dimension_semantics<parallel>], iteration_bounds = array<i64: 1>, scalar_prefetch = 0 : i64, scratch_operands = 0 : i64, tpu.core_type = #tpu.core_type<tc>, window_params = [{transform_indices = @transform_0, window_bounds = array<i64: 8, 32>}, {transform_indices = @transform_1, window_bounds = array<i64: 8, 32>}]} {
    %c0 = arith.constant 0 : index
    %c0_0 = arith.constant 0 : index
    %0 = vector.load %arg1[%c0, %c0_0] : memref<8x32xf32, #tpu.memory_space<vmem>>, vector<8x32xf32>
    %cst = arith.constant dense<0xFF800000> : vector<32xf32>
    %1 = vector.multi_reduction <maximumf>, %0, %cst [0] : vector<8x32xf32> to vector<32xf32>
    %2 = vector.shape_cast %1 : vector<32xf32> to vector<1x32xf32>
    %3 = vector.broadcast %2 : vector<1x32xf32> to vector<8x32xf32>
    %4 = arith.subf %0, %3 : vector<8x32xf32>
    %5 = math.exp %4 : vector<8x32xf32>
    %c0_1 = arith.constant 0 : index
    %c0_2 = arith.constant 0 : index
    %6 = vector.load %arg2[%c0_1, %c0_2] : memref<8x32xf32, #tpu.memory_space<vmem>>, vector<8x32xf32>
    tpu.vector_store %arg2[%c0_1, %c0_2], %5 {strides = array<i32>} : memref<8x32xf32, #tpu.memory_space<vmem>>, vector<8x32xf32>,
    %c0_3 = arith.constant 0 : index
    %c0_4 = arith.constant 0 : index
    %7 = vector.load %arg2[%c0_3, %c0_4] : memref<8x32xf32, #tpu.memory_space<vmem>>, vector<8x32xf32>
    %cst_5 = arith.constant dense<0.000000e+00> : vector<32xf32>
    %8 = vector.multi_reduction <add>, %7, %cst_5 [0] : vector<8x32xf32> to vector<32xf32>
    %9 = vector.shape_cast %8 : vector<32xf32> to vector<1x32xf32>
    %10 = tpu.reciprocal %9 : vector<1x32xf32> -> vector<1x32xf32>
    %c0_6 = arith.constant 0 : index
    %c0_7 = arith.constant 0 : index
    %11 = vector.load %arg2[%c0_6, %c0_7] : memref<8x32xf32, #tpu.memory_space<vmem>>, vector<8x32xf32>
    %12 = vector.broadcast %10 : vector<1x32xf32> to vector<8x32xf32>
    %13 = arith.mulf %11, %12 : vector<8x32xf32>
    %c0_8 = arith.constant 0 : index
    %c0_9 = arith.constant 0 : index
    %14 = vector.load %arg2[%c0_8, %c0_9] : memref<8x32xf32, #tpu.memory_space<vmem>>, vector<8x32xf32>
    tpu.vector_store %arg2[%c0_8, %c0_9], %13 {strides = array<i32>} : memref<8x32xf32, #tpu.memory_space<vmem>>, vector<8x32xf32>,
    return
  }
  func.func @transform_0(%arg0: i32) -> (i32, i32) {
    %c0_i32 = arith.constant 0 : i32
    %c0_i32_0 = arith.constant 0 : i32
    return %c0_i32, %arg0 : i32, i32
  }
  func.func @transform_1(%arg0: i32) -> (i32, i32) {
    %c0_i32 = arith.constant 0 : i32
    %c0_i32_0 = arith.constant 0 : i32
    return %c0_i32, %arg0 : i32, i32
  }
}

</mosaic_0001>

<llo_original>
// kernel: tpu_custom_call.1
$region0: #{tpu_custom_call.1}
  #allocation0 [shape = 'u32[]', space=smem, size = 0x4, offset = 0x4, fixed_abs, tag = 'smem constant byte address 0x4 - core index']
  #allocation1 [shape = 'u32[72,128]{1,0:T(1,128)}', space=vmem, size = 0x9000, scoped, tag = 'internal scratch']
  %s0 = inlined_call_operand.hbm [shape: f32[8,32], index: 0, kind: input, shape index: {}]
  %s1 = inlined_call_operand.hbm [shape: f32[8,32], index: 1, kind: output, shape index: {}]
  %s2 = sld [smem:[#allocation0]]
  $region18: #{tpu_custom_call.1} parent=0
    _
  %s4 = ssub.s32 1, %s2
  %s5 = scalar_select 0, %s4, %s2
  $region1: #{tpu_custom_call.1} parent=0
    #allocation2 [shape = 'u8[4096]{0}', space=vmem, size = 0x1000, scoped, tag = 'input window, operand 0, single buffered']
    #allocation3 [shape = 's32[1]{0}', space=sflag, size = 0x4, scoped, tag = 'scoped memory for tpu_custom_call.1']
    #allocation4 [shape = 's32[1]{0}', space=sflag, size = 0x4, scoped, tag = 'scoped memory for tpu_custom_call.1']
    #allocation5 [shape = 'u8[4096]{0}', space=vmem, size = 0x1000, scoped, tag = 'output window, operand 0, single buffered']
    %6 = vsyncpa [#allocation3], 0
    %7 = vsyncpa [#allocation4], 0
    // Predicated region
    $region2: #{tpu_custom_call.1} parent=1 // pred_check
      _
    $region3: #{tpu_custom_call.1} parent=1 // pred_check_branch
      %9 = sbr.rel (0) target = $region5
    $region4: #{tpu_custom_call.1} parent=1 // pred_region
      %11 = vsyncadd [#allocation3], 0
      %s13 = sshll.u32 %s0, 4
      %s14 = int_to_ptr.hbm [resolvable:$true] %s13
      %s15 = sshll.u32 [#allocation2], 4
      %s16 = int_to_ptr.vmem [resolvable:$true] %s15
      %18 = dma.hbm_to_vmem [thread:$0]  %s14, 128, %s16, [#allocation3]
    $region5: #{tpu_custom_call.1} parent=1 // pred_fallthru
      _
    // Predicated region
    $region6: #{tpu_custom_call.1} parent=1 // pred_check
      _
    $region7: #{tpu_custom_call.1} parent=1 // pred_check_branch
      %20 = sbr.rel (0) target = $region9
    $region8: #{tpu_custom_call.1} parent=1 // pred_region
      %22 = dma.done [#allocation3], 128
    $region9: #{tpu_custom_call.1} parent=1 // pred_fallthru
      _
    %v23 = vld [vmem:[#allocation2] sm:$0xff]
    %vm24 = vcmask 261120
    %v25 = vsel %vm24, %v23, -inf
    %v26 = vrot.slane %v25, 4
    %v27 = vmax.f32 %v25, %v26
    %v28 = vrot.slane %v27, 2
    %v29 = vmax.f32 %v27, %v28
    %v30 = vrot.slane %v29, 1
    %v31 = vmax.f32 %v29, %v30
    %v32 = vsub.f32 %v23, %v31
    %v33 = vmul.f32 %v32, 1.442695
    %v34 = vpow.pop %v33
    %35 = vst.msk [vmem:[#allocation5] sm:$0xff] %vm24, %v34
    %v36 = vld [vmem:[#allocation5] sm:$0xff]
    %v37 = vsel %vm24, %v36, 0.0
    %v38 = vrot.slane %v37, 4
    %v39 = vadd.f32 %v37, %v38
    %v40 = vrot.slane %v39, 2
    %v41 = vadd.f32 %v39, %v40
    %v42 = vrot.slane %v41, 1
    %v43 = vadd.f32 %v41, %v42
    %v44 = vrcp.pop %v43
    %v45 = vmul.f32 %v43, %v44
    %v46 = vsub.f32 1.0, %v45
    %v47 = vmul.f32 %v44, %v46
    %v48 = vadd.f32 %v44, %v47
    %vm49 = vweird.f32 %v43
    %vm50 = vweird.f32 %v44
    %vm51 = vmor %vm49, %vm50
    %v52 = vsel %vm51, %v44, %v48
    %v53 = vand.u32 2147483647, %v43
    %vm54 = vcmp.eq.f32.partialorder %v53, 8.507059e+37
    %v55 = vand.u32 %v43, 2147483648
    %v56 = vor.u32 1.1754944e-38, %v55
    %v57 = vsel %vm54, %v56, %v52
    %v58 = vmul.f32 %v36, %v57
    %59 = vst.msk [vmem:[#allocation5] sm:$0xff] %vm24, %v58
    // Predicated region
    $region10: #{tpu_custom_call.1} parent=1 // pred_check
      _
    $region11: #{tpu_custom_call.1} parent=1 // pred_check_branch
      %61 = sbr.rel (0) target = $region13
    $region12: #{tpu_custom_call.1} parent=1 // pred_region
      %63 = vsyncadd [#allocation4], 0
      %s65 = sshll.u32 [#allocation5], 4
      %s66 = int_to_ptr.vmem [resolvable:$true] %s65
      %s67 = sshll.u32 %s1, 4
      %s68 = int_to_ptr.hbm [resolvable:$true] %s67
      %70 = dma.vmem_to_hbm [thread:$0]  %s66, 128, %s68, [#allocation4]
    $region13: #{tpu_custom_call.1} parent=1 // pred_fallthru
      _
    // Predicated region
    $region14: #{tpu_custom_call.1} parent=1 // pred_check
      _
    $region15: #{tpu_custom_call.1} parent=1 // pred_check_branch
      %72 = sbr.rel (0) target = $region17
    $region16: #{tpu_custom_call.1} parent=1 // pred_region
      %74 = dma.done [#allocation4], 128
    $region17: #{tpu_custom_call.1} parent=1 // pred_fallthru
      _
    %75 = vsyncpa [#allocation3], 1
    %76 = vsyncpa [#allocation4], 1

</llo_original>
